<compile_context>
chip_gen: v5e
topology: v5e:2x2
jax: 0.10.0
libtpu: 0.0.40
codegen_flags: <defaults>
</compile_context>

<pallas_src>
import functools

import jax
import jax.numpy as jnp
from jax.experimental import pallas as pl
from jax.experimental.pallas import tpu as pltpu

FILTER_SIZES = (2, 3, 4)
NEG_BIG = -3e38  # finite "minus infinity" for the time mask


def _round_up(x, m):
    return (x + m - 1) // m * m


def textcnn_kernel(L, MAXK, emb_ref, wcat_ref, bcat_ref, mask_ref, wfc_ref, bfc_ref,
                   out_ref):
    """Fused TextCNN forward for one batch tile.

    emb_ref  : (TB, S_pad, E)   bf16 token embeddings (zero rows for padding ids)
    wcat_ref : (MAXK*E, N_pad)  bf16 conv filters, shift-major on the contraction
                                axis, concatenated (and zero-padded) along N
    bcat_ref : (1, N_pad)       f32 conv biases (zero in padding columns)
    mask_ref : (L, N_pad)       f32 additive mask: 0 where the window position is
                                valid for that column's filter width, -3e38 else
    wfc_ref  : (N_pad, C_pad)   f32 FC weight, zero-padded
    bfc_ref  : (1, C_pad)       f32 FC bias, zero-padded
    out_ref  : (TB, C_pad)      lane-dense logits block
    """
    # Conv-as-matmul, one wide MXU push: K = MAXK*E, N = N_pad.
    xwin = jnp.concatenate([emb_ref[:, i:i + L, :] for i in range(MAXK)], axis=-1)
    acc = jax.lax.dot_general(
        xwin, wcat_ref[...],
        dimension_numbers=(((2,), (0,)), ((), ())),
        preferred_element_type=jnp.float32)               # (TB, L, N_pad) f32

    # Mask invalid tail time positions per filter width, then max-pool over time.
    pooled = jnp.max(acc + mask_ref[...][None, :, :], axis=1)   # (TB, N_pad)

    # Bias after pool + ReLU:  max_l relu(s + b) == relu(max_l s + b).
    pooled = jnp.maximum(pooled + bcat_ref[...], 0.0)

    # TODO(synk): dropout(p=0.5) is stochastic in train mode; eval-mode identity here.
    logits = jnp.dot(pooled, wfc_ref[...], preferred_element_type=jnp.float32)
    out_ref[...] = (logits + bfc_ref[...]).astype(out_ref.dtype)


def pack_params(params, seq_len):
    """One-time packing of the module parameters for the kernel (call once)."""
    emb_table = params["embedding"].astype(jnp.bfloat16)          # (V, E)
    V, E = emb_table.shape
    F = params["conv_w"][0].shape[0]
    C = params["fc_w"].shape[1]
    NF = len(FILTER_SIZES)
    MAXK = max(FILTER_SIZES)
    S = seq_len
    L = S - min(FILTER_SIZES) + 1                                  # window count
    N_pad = _round_up(NF * F, 128)
    C_pad = _round_up(C, 128)

    # Stacked conv weight: row block i holds the shift-i rows of every filter,
    # columns are [k=2 | k=3 | k=4 | zero pad]; matches PyTorch (F,1,k,E)
    # row-major kernel layout.
    row_blocks = []
    for i in range(MAXK):
        cols = []
        for k, w in zip(FILTER_SIZES, params["conv_w"]):
            wk = w.reshape(F, k, E)                                # (F,1,k,E)->(F,k,E)
            if i < k:
                cols.append(wk[:, i, :].T)                         # (E, F)
            else:
                cols.append(jnp.zeros((E, F), jnp.float32))
        cols.append(jnp.zeros((E, N_pad - NF * F), jnp.float32))
        row_blocks.append(jnp.concatenate(cols, axis=1))           # (E, N_pad)
    wcat = jnp.concatenate(row_blocks, axis=0).astype(jnp.bfloat16)  # (MAXK*E, N_pad)

    bcat = jnp.concatenate(
        list(params["conv_b"]) + [jnp.zeros((N_pad - NF * F,), jnp.float32)]
    ).reshape(1, N_pad)

    # Additive time mask per output column.
    llim = jnp.concatenate(
        [jnp.full((F,), S - k + 1, jnp.int32) for k in FILTER_SIZES]
        + [jnp.full((N_pad - NF * F,), L, jnp.int32)])             # (N_pad,)
    l_idx = jnp.arange(L, dtype=jnp.int32)[:, None]
    mask = jnp.where(l_idx < llim[None, :], 0.0, NEG_BIG).astype(jnp.float32)

    wfc = jnp.zeros((N_pad, C_pad), jnp.float32).at[:NF * F, :C].set(params["fc_w"])
    bfc = jnp.zeros((1, C_pad), jnp.float32).at[0, :C].set(params["fc_b"])

    return {"emb_table": emb_table, "wcat": wcat, "bcat": bcat, "mask": mask,
            "wfc": wfc, "bfc": bfc, "seq_len": S, "num_classes": C,
            "pad_idx": V - 1}


def textcnn_forward(token_ids, packed):
    emb_table = packed["emb_table"]                                # (V, E) bf16
    V, E = emb_table.shape
    S = packed["seq_len"]
    C = packed["num_classes"]
    wcat, bcat, mask = packed["wcat"], packed["bcat"], packed["mask"]
    wfc, bfc = packed["wfc"], packed["bfc"]

    MAXK = max(FILTER_SIZES)
    L = S - min(FILTER_SIZES) + 1
    B, S_in = token_ids.shape
    assert S_in == S

    # --- batch tiling: big tiles, and >=2 grid steps when B allows (v7x 2 TCs) ---
    if B <= 8:
        TB = B
    else:
        TB = min(256, _round_up(B, 8))
        if _round_up(B, TB) == TB:                 # grid would be 1 -> split in two
            TB = max(8, _round_up((B + 1) // 2, 8))
    B_pad = _round_up(B, TB)

    S_pad = _round_up(L + MAXK - 1, 16)            # room for all shifts, bf16 packing

    KE, N_pad = wcat.shape
    C_pad = wfc.shape[1]

    # glue: pad the int32 token ids with padding_idx (zero embedding row) and let
    # the gather produce the padded bf16 (B_pad, S_pad, E) stream directly.
    tok = jnp.pad(token_ids, ((0, B_pad - B), (0, S_pad - S)),
                  constant_values=packed["pad_idx"])
    emb = jnp.take(emb_table, tok, axis=0)                          # (B_pad,S_pad,E)

    const2 = lambda b: (0, 0)
    out = pl.pallas_call(
        functools.partial(textcnn_kernel, L, MAXK),
        out_shape=jax.ShapeDtypeStruct((B_pad, C_pad), jnp.float32),
        grid=(B_pad // TB,),
        in_specs=[
            pl.BlockSpec((TB, S_pad, E), lambda b: (b, 0, 0)),      # emb tile
            pl.BlockSpec((KE, N_pad), const2),                      # conv W (resident)
            pl.BlockSpec((1, N_pad), const2),                       # conv b
            pl.BlockSpec((L, N_pad), const2),                       # additive mask
            pl.BlockSpec((N_pad, C_pad), const2),                   # fc W
            pl.BlockSpec((1, C_pad), const2),                       # fc b
        ],
        out_specs=pl.BlockSpec((TB, C_pad), lambda b: (b, 0)),
        compiler_params=pltpu.CompilerParams(
            dimension_semantics=("parallel",)),
    )(emb, wcat, bcat, mask, wfc, bfc)
    return out[:B, :C]


def init_params(key, vocab, embed, num_filters, num_classes):
    keys = jax.random.split(key, 2 + 2 * len(FILTER_SIZES) + 2)
    emb = jax.random.normal(keys[0], (vocab, embed), jnp.float32) * 0.1
    emb = emb.at[vocab - 1].set(0.0)               # padding_idx row
    conv_w, conv_b = [], []
    for i, k in enumerate(FILTER_SIZES):
        conv_w.append(jax.random.normal(keys[1 + 2 * i], (num_filters, 1, k, embed),
                                        jnp.float32) * 0.05)
        conv_b.append(jax.random.normal(keys[2 + 2 * i], (num_filters,),
                                        jnp.float32) * 0.05)
    fc_w = jax.random.normal(keys[-2], (num_filters * len(FILTER_SIZES), num_classes),
                             jnp.float32) * 0.05
    fc_b = jax.random.normal(keys[-1], (num_classes,), jnp.float32) * 0.05
    return {"embedding": emb, "conv_w": conv_w, "conv_b": conv_b,
            "fc_w": fc_w, "fc_b": fc_b}


def reference_forward(token_ids, params):
    """Pure-JAX reference (same math as the PyTorch module, eval mode, f32)."""
    emb = jnp.take(params["embedding"], token_ids, axis=0)
    B, S, E = emb.shape
    feats = []
    for k, w, b in zip(FILTER_SIZES, params["conv_w"], params["conv_b"]):
        Lk = S - k + 1
        xw = jnp.concatenate([emb[:, i:i + Lk, :] for i in range(k)], axis=-1)
        s = jnp.einsum("blk,fk->blf", xw, w.reshape(w.shape[0], -1)) + b[None, None, :]
        feats.append(jnp.max(jnp.maximum(s, 0.0), axis=1))
    feat = jnp.concatenate(feats, axis=-1)
    return feat @ params["fc_w"] + params["fc_b"]


if __name__ == "__main__":
    key = jax.random.PRNGKey(0)
    B, S, V, E, F, C = 2, 16, 50, 32, 32, 4

    k_tok, k_par = jax.random.split(key)
    token_ids = jax.random.randint(k_tok, (B, S), 0, V, dtype=jnp.int32)
    params = init_params(k_par, V, E, F, C)
    packed = pack_params(params, S)                # one-time weight packing

    out = textcnn_forward(token_ids, packed)
    out = jax.block_until_ready(out)

    ref = reference_forward(token_ids, params)
    assert out.shape == (B, C)
    # bf16 input stream (f32 accumulation) -> slightly looser tolerance vs f32 ref.
    assert jnp.allclose(out, ref, atol=1e-2, rtol=1e-2)
    print("KERNEL_OK")
</pallas_src>

<mosaic_0001>
module attributes {stable_mosaic.version = 11 : i64} {
  func.func @textcnn_kernel(%arg0: i32, %arg1: memref<2x32x32xbf16, #tpu.memory_space<vmem>>, %arg2: memref<128x128xbf16, #tpu.memory_space<vmem>>, %arg3: memref<1x128xf32, #tpu.memory_space<vmem>>, %arg4: memref<15x128xf32, #tpu.memory_space<vmem>>, %arg5: memref<128x128xf32, #tpu.memory_space<vmem>>, %arg6: memref<1x128xf32, #tpu.memory_space<vmem>>, %arg7: memref<2x128xf32, #tpu.memory_space<vmem>>) attributes {dimension_semantics = [#tpu.dimension_semantics<parallel>], iteration_bounds = array<i64: 1>, scalar_prefetch = 0 : i64, scratch_operands = 0 : i64, tpu.core_type = #tpu.core_type<tc>, window_params = [{transform_indices = @transform_0, window_bounds = array<i64: 2, 32, 32>}, {pipeline_mode = #tpu.pipeline_mode<synchronous>, transform_indices = @transform_1, window_bounds = array<i64: 128, 128>}, {pipeline_mode = #tpu.pipeline_mode<synchronous>, transform_indices = @transform_2, window_bounds = array<i64: 1, 128>}, {pipeline_mode = #tpu.pipeline_mode<synchronous>, transform_indices = @transform_3, window_bounds = array<i64: 15, 128>}, {pipeline_mode = #tpu.pipeline_mode<synchronous>, transform_indices = @transform_4, window_bounds = array<i64: 128, 128>}, {pipeline_mode = #tpu.pipeline_mode<synchronous>, transform_indices = @transform_5, window_bounds = array<i64: 1, 128>}, {transform_indices = @transform_6, window_bounds = array<i64: 2, 128>}]} {
    %c0 = arith.constant 0 : index
    %c0_0 = arith.constant 0 : index
    %c0_1 = arith.constant 0 : index
    %0 = vector.load %arg1[%c0, %c0_0, %c0_1] : memref<2x32x32xbf16, #tpu.memory_space<vmem>>, vector<2x15x32xbf16>
    %c0_2 = arith.constant 0 : index
    %c1 = arith.constant 1 : index
    %c0_3 = arith.constant 0 : index
    %1 = vector.load %arg1[%c0_2, %c1, %c0_3] : memref<2x32x32xbf16, #tpu.memory_space<vmem>>, vector<2x15x32xbf16>
    %c0_4 = arith.constant 0 : index
    %c2 = arith.constant 2 : index
    %c0_5 = arith.constant 0 : index
    %2 = vector.load %arg1[%c0_4, %c2, %c0_5] : memref<2x32x32xbf16, #tpu.memory_space<vmem>>, vector<2x15x32xbf16>
    %c0_6 = arith.constant 0 : index
    %c3 = arith.constant 3 : index
    %c0_7 = arith.constant 0 : index
    %3 = vector.load %arg1[%c0_6, %c3, %c0_7] : memref<2x32x32xbf16, #tpu.memory_space<vmem>>, vector<2x15x32xbf16>
    %4 = tpu.concatenate %0, %1, %2, %3 in 2 : vector<2x15x32xbf16>, vector<2x15x32xbf16>, vector<2x15x32xbf16>, vector<2x15x32xbf16> -> vector<2x15x128xbf16>
    %c0_8 = arith.constant 0 : index
    %c0_9 = arith.constant 0 : index
    %5 = vector.load %arg2[%c0_8, %c0_9] : memref<128x128xbf16, #tpu.memory_space<vmem>>, vector<128x128xbf16>
    %cst = arith.constant dense<0.000000e+00> : vector<2x15x128xf32>
    %6 = tpu.matmul %4, %5, %cst {dimension_numbers = #tpu.dot_dimension_numbers<[2], [0], [0, 1], [1], [0, 0, 0, 1, 1, 1], [], []>} : vector<2x15x128xbf16>, vector<128x128xbf16>, vector<2x15x128xf32> -> vector<2x15x128xf32>
    %c0_10 = arith.constant 0 : index
    %c0_11 = arith.constant 0 : index
    %7 = vector.load %arg4[%c0_10, %c0_11] : memref<15x128xf32, #tpu.memory_space<vmem>>, vector<15x128xf32>
    %8 = vector.shape_cast %7 : vector<15x128xf32> to vector<1x15x128xf32>
    %9 = vector.broadcast %8 : vector<1x15x128xf32> to vector<2x15x128xf32>
    %10 = arith.addf %6, %9 : vector<2x15x128xf32>
    %cst_12 = arith.constant dense<0xFF800000> : vector<2x128xf32>
    %11 = vector.multi_reduction <maximumf>, %10, %cst_12 [1] : vector<2x15x128xf32> to vector<2x128xf32>
    %c0_13 = arith.constant 0 : index
    %c0_14 = arith.constant 0 : index
    %12 = vector.load %arg3[%c0_13, %c0_14] : memref<1x128xf32, #tpu.memory_space<vmem>>, vector<1x128xf32>
    %13 = vector.broadcast %12 : vector<1x128xf32> to vector<2x128xf32>
    %14 = arith.addf %11, %13 : vector<2x128xf32>
    %cst_15 = arith.constant 0.000000e+00 : f32
    %15 = vector.broadcast %cst_15 : f32 to vector<2x128xf32>
    %16 = arith.maximumf %14, %15 : vector<2x128xf32>
    %c0_16 = arith.constant 0 : index
    %c0_17 = arith.constant 0 : index
    %17 = vector.load %arg5[%c0_16, %c0_17] : memref<128x128xf32, #tpu.memory_space<vmem>>, vector<128x128xf32>
    %cst_18 = arith.constant dense<0.000000e+00> : vector<2x128xf32>
    %18 = tpu.matmul %16, %17, %cst_18 {dimension_numbers = #tpu.dot_dimension_numbers<[1], [0], [0], [1], [0, 0, 1, 1], [], []>} : vector<2x128xf32>, vector<128x128xf32>, vector<2x128xf32> -> vector<2x128xf32>
    %c0_19 = arith.constant 0 : index
    %c0_20 = arith.constant 0 : index
    %19 = vector.load %arg6[%c0_19, %c0_20] : memref<1x128xf32, #tpu.memory_space<vmem>>, vector<1x128xf32>
    %20 = vector.broadcast %19 : vector<1x128xf32> to vector<2x128xf32>
    %21 = arith.addf %18, %20 : vector<2x128xf32>
    %c0_21 = arith.constant 0 : index
    %c0_22 = arith.constant 0 : index
    %22 = vector.load %arg7[%c0_21, %c0_22] : memref<2x128xf32, #tpu.memory_space<vmem>>, vector<2x128xf32>
    tpu.vector_store %arg7[%c0_21, %c0_22], %21 {strides = array<i32>} : memref<2x128xf32, #tpu.memory_space<vmem>>, vector<2x128xf32>,
    return
  }
  func.func @transform_0(%arg0: i32) -> (i32, i32, i32) {
    %c0_i32 = arith.constant 0 : i32
    %c0_i32_0 = arith.constant 0 : i32
    %c0_i32_1 = arith.constant 0 : i32
    return %arg0, %c0_i32, %c0_i32_0 : i32, i32, i32
  }
  func.func @transform_1(%arg0: i32) -> (i32, i32) {
    %c0_i32 = arith.constant 0 : i32
    %c0_i32_0 = arith.constant 0 : i32
    %c0_i32_1 = arith.constant 0 : i32
    return %c0_i32, %c0_i32_0 : i32, i32
  }
  func.func @transform_2(%arg0: i32) -> (i32, i32) {
    %c0_i32 = arith.constant 0 : i32
    %c0_i32_0 = arith.constant 0 : i32
    %c0_i32_1 = arith.constant 0 : i32
    return %c0_i32, %c0_i32_0 : i32, i32
  }
  func.func @transform_3(%arg0: i32) -> (i32, i32) {
    %c0_i32 = arith.constant 0 : i32
    %c0_i32_0 = arith.constant 0 : i32
    %c0_i32_1 = arith.constant 0 : i32
    return %c0_i32, %c0_i32_0 : i32, i32
  }
  func.func @transform_4(%arg0: i32) -> (i32, i32) {
    %c0_i32 = arith.constant 0 : i32
    %c0_i32_0 = arith.constant 0 : i32
    %c0_i32_1 = arith.constant 0 : i32
    return %c0_i32, %c0_i32_0 : i32, i32
  }
  func.func @transform_5(%arg0: i32) -> (i32, i32) {
    %c0_i32 = arith.constant 0 : i32
    %c0_i32_0 = arith.constant 0 : i32
    %c0_i32_1 = arith.constant 0 : i32
    return %c0_i32, %c0_i32_0 : i32, i32
  }
  func.func @transform_6(%arg0: i32) -> (i32, i32) {
    %c0_i32 = arith.constant 0 : i32
    %c0_i32_0 = arith.constant 0 : i32
    return %arg0, %c0_i32 : i32, i32
  }
}

</mosaic_0001>

<llo_original>
// kernel: tpu_custom_call.1
$region0: #{tpu_custom_call.1}
  #allocation0 [shape = 'u32[]', space=smem, size = 0x4, offset = 0x4, fixed_abs, tag = 'smem constant byte address 0x4 - core index']
  #allocation1 [shape = 'u32[72,128]{1,0:T(1,128)}', space=vmem, size = 0x9000, scoped, tag = 'internal scratch']
  %s0 = inlined_call_operand.hbm [shape: bf16[2,32,32], index: 0, kind: input, shape index: {}]
  %s1 = inlined_call_operand.hbm [shape: bf16[128,128], index: 1, kind: input, shape index: {}]
  %s2 = inlined_call_operand.vmem [shape: f32[1,128], index: 2, kind: input, shape index: {}]
  %s3 = inlined_call_operand.hbm [shape: f32[15,128], index: 3, kind: input, shape index: {}]
  %s4 = inlined_call_operand.hbm [shape: f32[128,128], index: 4, kind: input, shape index: {}]
  %s5 = inlined_call_operand.vmem [shape: f32[1,128], index: 5, kind: input, shape index: {}]
  %s6 = inlined_call_operand.hbm [shape: f32[2,128], index: 6, kind: output, shape index: {}]
  %s7 = sld [smem:[#allocation0]]
  $region50: #{tpu_custom_call.1} parent=0
    _
  %s9 = ssub.s32 1, %s7
  %s10 = scalar_select 0, %s9, %s7
  $region1: #{tpu_custom_call.1} parent=0
    #allocation2 [shape = 'u8[16384]{0}', space=vmem, size = 0x4000, scoped, tag = 'input window, operand 0, single buffered']
    #allocation3 [shape = 's32[1]{0}', space=sflag, size = 0x4, scoped, tag = 'scoped memory for tpu_custom_call.1']
    #allocation4 [shape = 's32[1]{0}', space=sflag, size = 0x4, scoped, tag = 'scoped memory for tpu_custom_call.1']
    #allocation5 [shape = 'u8[32768]{0}', space=vmem, size = 0x8000, scoped, tag = 'input window, operand 1, single buffered']
    #allocation6 [shape = 's32[1]{0}', space=sflag, size = 0x4, scoped, tag = 'scoped memory for tpu_custom_call.1']
    #allocation7 [shape = 'u8[8192]{0}', space=vmem, size = 0x2000, scoped, tag = 'input window, operand 3, single buffered']
    #allocation8 [shape = 'u8[65536]{0}', space=vmem, size = 0x10000, scoped, tag = 'input window, operand 4, single buffered']
    #allocation9 [shape = 's32[1]{0}', space=sflag, size = 0x4, scoped, tag = 'scoped memory for tpu_custom_call.1']
    #allocation10 [shape = 'u8[1024]{0}', space=vmem, size = 0x400, scoped, tag = 'output window, operand 0, single buffered']
    %11 = vsyncpa [#allocation3], 0
    %12 = vsyncpa [#allocation6], 0
    %13 = vsyncpa [#allocation9], 0
    %14 = vsyncpa [#allocation4], 0
    // Predicated region
    $region2: #{tpu_custom_call.1} parent=1 // pred_check
      _
    $region3: #{tpu_custom_call.1} parent=1 // pred_check_branch
      %16 = sbr.rel (0) target = $region5
    $region4: #{tpu_custom_call.1} parent=1 // pred_region
      %18 = vsyncadd [#allocation3], 0
      %s19 = sshll.u32 %s0, 4
      %s20 = int_to_ptr.hbm [resolvable:$true] %s19
      %s21 = sshll.u32 [#allocation2], 4
      %s22 = int_to_ptr.vmem [resolvable:$true] %s21
      %27 = dma.hbm_to_vmem [thread:$0]  %s20, 512, %s22, [#allocation3], 64, 64, 4
    $region5: #{tpu_custom_call.1} parent=1 // pred_fallthru
      _
    // Predicated region
    $region6: #{tpu_custom_call.1} parent=1 // pred_check
      _
    $region7: #{tpu_custom_call.1} parent=1 // pred_check_branch
      %29 = sbr.rel (0) target = $region9
    $region8: #{tpu_custom_call.1} parent=1 // pred_region
      %31 = vsyncadd [#allocation6], 0
      %s32 = sshll.u32 %s1, 4
      %s33 = int_to_ptr.hbm [resolvable:$true] %s32
      %s34 = sshll.u32 [#allocation5], 4
      %s35 = int_to_ptr.vmem [resolvable:$true] %s34
      %40 = dma.hbm_to_vmem [thread:$0]  %s33, 1024, %s35, [#allocation6], 64, 64, 4
    $region9: #{tpu_custom_call.1} parent=1 // pred_fallthru
      _
    // Predicated region
    $region10: #{tpu_custom_call.1} parent=1 // pred_check
      _
    $region11: #{tpu_custom_call.1} parent=1 // pred_check_branch
      %42 = sbr.rel (0) target = $region13
    $region12: #{tpu_custom_call.1} parent=1 // pred_region
      _
    $region13: #{tpu_custom_call.1} parent=1 // pred_fallthru
      _
    // Predicated region
    $region14: #{tpu_custom_call.1} parent=1 // pred_check
      _
    $region15: #{tpu_custom_call.1} parent=1 // pred_check_branch
      %44 = sbr.rel (0) target = $region17
    $region16: #{tpu_custom_call.1} parent=1 // pred_region
      %46 = vsyncadd [#allocation6], 0
      %s47 = sshll.u32 %s3, 4
      %s48 = int_to_ptr.hbm [resolvable:$true] %s47
      %s49 = sshll.u32 [#allocation7], 4
      %s50 = int_to_ptr.vmem [resolvable:$true] %s49
      %55 = dma.hbm_to_vmem [thread:$0]  %s48, 256, %s50, [#allocation6], 128, 128, 8
    $region17: #{tpu_custom_call.1} parent=1 // pred_fallthru
      _
    // Predicated region
    $region18: #{tpu_custom_call.1} parent=1 // pred_check
      _
    $region19: #{tpu_custom_call.1} parent=1 // pred_check_branch
      %57 = sbr.rel (0) target = $region21
    $region20: #{tpu_custom_call.1} parent=1 // pred_region
      %59 = vsyncadd [#allocation9], 0
      %s60 = sshll.u32 %s4, 4
      %s61 = int_to_ptr.hbm [resolvable:$true] %s60
      %s62 = sshll.u32 [#allocation8], 4
      %s63 = int_to_ptr.vmem [resolvable:$true] %s62
      %68 = dma.hbm_to_vmem [thread:$0]  %s61, 2048, %s63, [#allocation9], 128, 128, 8
    $region21: #{tpu_custom_call.1} parent=1 // pred_fallthru
      _
    // Predicated region
    $region22: #{tpu_custom_call.1} parent=1 // pred_check
      _
    $region23: #{tpu_custom_call.1} parent=1 // pred_check_branch
      %70 = sbr.rel (0) target = $region25
    $region24: #{tpu_custom_call.1} parent=1 // pred_region
      _
    $region25: #{tpu_custom_call.1} parent=1 // pred_fallthru
      _
    // Predicated region
    $region26: #{tpu_custom_call.1} parent=1 // pred_check
      _
    $region27: #{tpu_custom_call.1} parent=1 // pred_check_branch
      %72 = sbr.rel (0) target = $region29
    $region28: #{tpu_custom_call.1} parent=1 // pred_region
      %74 = dma.done [#allocation3], 512
    $region29: #{tpu_custom_call.1} parent=1 // pred_fallthru
      _
    // Predicated region
    $region30: #{tpu_custom_call.1} parent=1 // pred_check
      _
    $region31: #{tpu_custom_call.1} parent=1 // pred_check_branch
      %76 = sbr.rel (0) target = $region33
    $region32: #{tpu_custom_call.1} parent=1 // pred_region
      %78 = dma.done [#allocation6], 1024
    $region33: #{tpu_custom_call.1} parent=1 // pred_fallthru
      _
    // Predicated region
    $region34: #{tpu_custom_call.1} parent=1 // pred_check
      _
    $region35: #{tpu_custom_call.1} parent=1 // pred_check_branch
      %80 = sbr.rel (0) target = $region37
    $region36: #{tpu_custom_call.1} parent=1 // pred_region
      %82 = dma.done [#allocation6], 256
    $region37: #{tpu_custom_call.1} parent=1 // pred_fallthru
      _
    // Predicated region
    $region38: #{tpu_custom_call.1} parent=1 // pred_check
      _
    $region39: #{tpu_custom_call.1} parent=1 // pred_check_branch
      %84 = sbr.rel (0) target = $region41
    $region40: #{tpu_custom_call.1} parent=1 // pred_region
      %86 = dma.done [#allocation9], 2048
    $region41: #{tpu_custom_call.1} parent=1 // pred_fallthru
      _
    %v87 = vld [vmem:[#allocation2] sm:$0xf]
    %v88 = vld [vmem:[#allocation2 + $0x4] sm:$0xf]
    %v89 = vld [vmem:[#allocation2 + $0x10] sm:$0xf]
    %v90 = vld [vmem:[#allocation2 + $0x14] sm:$0xf]
    %v91 = vld [vmem:[#allocation2] sm:$0xe]
    %v92 = vld [vmem:[#allocation2 + $0x8] sm:$0x1]
    %v93 = vld [vmem:[#allocation2 + $0x10] sm:$0xe]
    %v94 = vld [vmem:[#allocation2 + $0x18] sm:$0x1]
    %v99 = vunpack.c.l.b16 %v87
    %v100 = vunpack.c.l.b16 %v88
    %v101 = vunpack.c.l.b16 %v89
    %v102 = vunpack.c.l.b16 %v90
    %v103 = vpack.c.b16 %v100, %v99
    %v104 = vpack.c.b16 %v102, %v101
    %v106 = vshrl.u32 %v103, 16
    %v108 = vshll.u32 %v103, 16
    %v110 = vrot.slane %v108, 1
    %v111 = vor.u32 %v106, %v110
    %v113 = vshrl.u32 %v104, 16
    %v115 = vshll.u32 %v104, 16
    %v117 = vrot.slane %v115, 1
    %v118 = vor.u32 %v113, %v117
    %119 = vrot.lane.b32.xlu0 %v111, 32
    %v120 = vpop.permute.xlu0 %119
    %121 = vrot.lane.b32.xlu0 %v118, 32
    %v122 = vpop.permute.xlu0 %121
    %v127 = vunpack.c.l.b16 %v91
    %v128 = vunpack.c.l.b16 %v92
    %v129 = vunpack.c.l.b16 %v93
    %v130 = vunpack.c.l.b16 %v94
    %v131 = vpack.c.b16 %v100, %v127
    %v132 = vpack.c.b16 %v128, %v128
    %v133 = vpack.c.b16 %v102, %v129
    %v134 = vpack.c.b16 %v130, %v130
    %vm135 = vcmask 1046528
    %v136 = vrot.slane %v131, 1
    %v137 = vrot.slane %v132, 1
    %v138 = vsel %vm135, %v136, %v137
    %v139 = vrot.slane %v133, 1
    %v140 = vrot.slane %v134, 1
    %v141 = vsel %vm135, %v139, %v140
    %142 = vrot.lane.b32.xlu0 %v138, 64
    %v143 = vpop.permute.xlu0 %142
    %144 = vrot.lane.b32.xlu0 %v141, 64
    %v145 = vpop.permute.xlu0 %144
    %vm146 = vsmask.f32 6400
    %v148 = vshrl.u32 %v131, 16
    %v150 = vrot.slane %v148, 1
    %v151 = vshll.u32 %v131, 16
    %v153 = vrot.slane %v151, 2
    %v154 = vor.u32 %v150, %v153
    %v156 = vshrl.u32 %v132, 16
    %v158 = vrot.slane %v156, 1
    %v159 = vshll.u32 %v132, 16
    %v161 = vrot.slane %v159, 2
    %v162 = vor.u32 %v158, %v161
    %v163 = vsel %vm146, %v154, %v162
    %v165 = vshrl.u32 %v133, 16
    %v167 = vrot.slane %v165, 1
    %v168 = vshll.u32 %v133, 16
    %v170 = vrot.slane %v168, 2
    %v171 = vor.u32 %v167, %v170
    %v173 = vshrl.u32 %v134, 16
    %v175 = vrot.slane %v173, 1
    %v176 = vshll.u32 %v134, 16
    %v178 = vrot.slane %v176, 2
    %v179 = vor.u32 %v175, %v178
    %v180 = vsel %vm146, %v171, %v179
    %181 = vrot.lane.b32.xlu0 %v163, 96
    %v182 = vpop.permute.xlu0 %181
    %183 = vrot.lane.b32.xlu0 %v180, 96
    %v184 = vpop.permute.xlu0 %183
    %vm185 = vcmask 261120
    %v187 = vsel %vm185, %v103, %v120
    %v189 = vsel %vm185, %v104, %v122
    %vm190 = vcmask 523264
    %v192 = vsel %vm190, %v187, %v143
    %v194 = vsel %vm190, %v189, %v145
    %vm195 = vcmask 785408
    %v197 = vsel %vm195, %v192, %v182
    %v199 = vsel %vm195, %v194, %v184
    %v200 = vld [vmem:[#allocation5] sm:$0xf]
    %v201 = vld [vmem:[#allocation5 + $0x4] sm:$0xf]
    %v202 = vld [vmem:[#allocation5 + $0x8] sm:$0xf]
    %v203 = vld [vmem:[#allocation5 + $0xc] sm:$0xf]
    %v204 = vld [vmem:[#allocation5 + $0x10] sm:$0xf]
    %v205 = vld [vmem:[#allocation5 + $0x14] sm:$0xf]
    %v206 = vld [vmem:[#allocation5 + $0x18] sm:$0xf]
    %v207 = vld [vmem:[#allocation5 + $0x1c] sm:$0xf]
    %v208 = vld [vmem:[#allocation5 + $0x20] sm:$0xf]
    %v209 = vld [vmem:[#allocation5 + $0x24] sm:$0xf]
    %v210 = vld [vmem:[#allocation5 + $0x28] sm:$0xf]
    %v211 = vld [vmem:[#allocation5 + $0x2c] sm:$0xf]
    %v212 = vld [vmem:[#allocation5 + $0x30] sm:$0xf]
    %v213 = vld [vmem:[#allocation5 + $0x34] sm:$0xf]
    %v214 = vld [vmem:[#allocation5 + $0x38] sm:$0xf]
    %v215 = vld [vmem:[#allocation5 + $0x3c] sm:$0xf]
    %v216 = vld [vmem:[#allocation7] sm:$0xff]
    %v217 = vld [vmem:[#allocation7 + $0x8] sm:$0x7f]
    %v220 = vrot.slane %v197, 1
    %v221 = vrot.slane %v197, 2
    %v222 = vrot.slane %v197, 3
    %v223 = vrot.slane %v197, 4
    %v224 = vrot.slane %v197, 5
    %v225 = vrot.slane %v197, 6
    %v226 = vrot.slane %v197, 7
    %v227 = vrot.slane %v199, 1
    %v228 = vrot.slane %v199, 2
    %v229 = vrot.slane %v199, 3
    %v230 = vrot.slane %v199, 4
    %v231 = vrot.slane %v199, 5
    %v232 = vrot.slane %v199, 6
    %v233 = vrot.slane %v199, 7
    %v234 = vunpack.i.l.s16 %v197
    %v235 = vunpack.i.h.s16 %v197
    %v236 = vunpack.i.l.s16 %v220
    %v237 = vunpack.i.h.s16 %v220
    %v238 = vunpack.i.l.s16 %v221
    %v239 = vunpack.i.h.s16 %v221
    %v240 = vunpack.i.l.s16 %v222
    %v241 = vunpack.i.h.s16 %v222
    %v242 = vunpack.i.l.s16 %v223
    %v243 = vunpack.i.h.s16 %v223
    %v244 = vunpack.i.l.s16 %v224
    %v245 = vunpack.i.h.s16 %v224
    %v246 = vunpack.i.l.s16 %v225
    %v247 = vunpack.i.h.s16 %v225
    %v248 = vunpack.i.l.s16 %v226
    %v249 = vunpack.i.l.s16 %v199
    %v250 = vunpack.i.h.s16 %v199
    %v251 = vunpack.i.l.s16 %v227
    %v252 = vunpack.i.h.s16 %v227
    %v253 = vunpack.i.l.s16 %v228
    %v254 = vunpack.i.h.s16 %v228
    %v255 = vunpack.i.l.s16 %v229
    %v256 = vunpack.i.h.s16 %v229
    %v257 = vunpack.i.l.s16 %v230
    %v258 = vunpack.i.h.s16 %v230
    %v259 = vunpack.i.l.s16 %v231
    %v260 = vunpack.i.h.s16 %v231
    %v261 = vunpack.i.l.s16 %v232
    %v262 = vunpack.i.h.s16 %v232
    %v263 = vunpack.i.l.s16 %v233
    %v266 = vrot.slane %v216, 1
    %v267 = vrot.slane %v216, 2
    %v268 = vrot.slane %v216, 3
    %v269 = vrot.slane %v216, 4
    %v270 = vrot.slane %v216, 5
    %v271 = vrot.slane %v216, 6
    %v272 = vrot.slane %v216, 7
    %v273 = vrot.slane %v217, 1
    %v274 = vrot.slane %v217, 2
    %v275 = vrot.slane %v217, 3
    %v276 = vrot.slane %v217, 4
    %v277 = vrot.slane %v217, 5
    %v278 = vrot.slane %v217, 6
    %v279 = vpack.i.b16 %v235, %v234
    %v280 = vpack.i.b16 %v237, %v236
    %v281 = vpack.i.b16 %v239, %v238
    %v282 = vpack.i.b16 %v241, %v240
    %v283 = vpack.i.b16 %v243, %v242
    %v284 = vpack.i.b16 %v245, %v244
    %v285 = vpack.i.b16 %v247, %v246
    %v286 = vpack.i.b16 %v249, %v248
    %v287 = vpack.i.b16 %v251, %v250
    %v288 = vpack.i.b16 %v253, %v252
    %v289 = vpack.i.b16 %v255, %v254
    %v290 = vpack.i.b16 %v257, %v256
    %v291 = vpack.i.b16 %v259, %v258
    %v292 = vpack.i.b16 %v261, %v260
    %v293 = vpack.i.b16 %v263, %v262
    %295 = vst [vmem:[#allocation1] ss:$9 sm:$0xff] %v279
    %s297 = scalar_lea.vmem [#allocation1], 1
    %298 = vst [vmem:[%s297] ss:$9 sm:$0xff] %v280
    %s300 = scalar_lea.vmem [#allocation1], 2
    %301 = vst [vmem:[%s300] ss:$9 sm:$0xff] %v281
    %s303 = scalar_lea.vmem [#allocation1], 3
    %304 = vst [vmem:[%s303] ss:$9 sm:$0xff] %v282
    %s306 = scalar_lea.vmem [#allocation1], 4
    %307 = vst [vmem:[%s306] ss:$9 sm:$0xff] %v283
    %s309 = scalar_lea.vmem [#allocation1], 5
    %310 = vst [vmem:[%s309] ss:$9 sm:$0xff] %v284
    %s312 = scalar_lea.vmem [#allocation1], 6
    %313 = vst [vmem:[%s312] ss:$9 sm:$0xff] %v285
    %s315 = scalar_lea.vmem [#allocation1], 7
    %316 = vst [vmem:[%s315] ss:$9 sm:$0xff] %v286
    %v317 = vld [vmem:[#allocation1] sm:$0xff]
    %319 = vst [vmem:[#allocation1] ss:$9 sm:$0xff] %v287
    %321 = vst [vmem:[%s297] ss:$9 sm:$0xff] %v288
    %323 = vst [vmem:[%s300] ss:$9 sm:$0xff] %v289
    %325 = vst [vmem:[%s303] ss:$9 sm:$0xff] %v290
    %327 = vst [vmem:[%s306] ss:$9 sm:$0xff] %v291
    %329 = vst [vmem:[%s309] ss:$9 sm:$0xff] %v292
    %331 = vst [vmem:[%s312] ss:$9 sm:$0xff] %v293
    %v332 = vld [vmem:[#allocation1] sm:$0xff]
    %v351 = vunpack.c.l.b16 %v200
    %v352 = vunpack.c.l.b16 %v201
    %v353 = vunpack.c.l.b16 %v202
    %v354 = vunpack.c.l.b16 %v203
    %v355 = vunpack.c.l.b16 %v204
    %v356 = vunpack.c.l.b16 %v205
    %v357 = vunpack.c.l.b16 %v206
    %v358 = vunpack.c.l.b16 %v207
    %v359 = vunpack.c.l.b16 %v208
    %v360 = vunpack.c.l.b16 %v209
    %v361 = vunpack.c.l.b16 %v210
    %v362 = vunpack.c.l.b16 %v211
    %v363 = vunpack.c.l.b16 %v212
    %v364 = vunpack.c.l.b16 %v213
    %v365 = vunpack.c.l.b16 %v214
    %v366 = vunpack.c.l.b16 %v215
    %v367 = vpack.c.b16 %v352, %v351
    %v368 = vpack.c.b16 %v354, %v353
    %v369 = vpack.c.b16 %v356, %v355
    %v370 = vpack.c.b16 %v358, %v357
    %v371 = vpack.c.b16 %v360, %v359
    %v372 = vpack.c.b16 %v362, %v361
    %v373 = vpack.c.b16 %v364, %v363
    %v374 = vpack.c.b16 %v366, %v365
    %383 = vst [vmem:[#allocation1] ss:$9 sm:$0xff] %v216
    %s384 = scalar_lea.vmem [#allocation1], 1
    %385 = vst [vmem:[%s384] ss:$9 sm:$0xff] %v266
    %s386 = scalar_lea.vmem [#allocation1], 2
    %387 = vst [vmem:[%s386] ss:$9 sm:$0xff] %v267
    %s388 = scalar_lea.vmem [#allocation1], 3
    %389 = vst [vmem:[%s388] ss:$9 sm:$0xff] %v268
    %s390 = scalar_lea.vmem [#allocation1], 4
    %391 = vst [vmem:[%s390] ss:$9 sm:$0xff] %v269
    %s392 = scalar_lea.vmem [#allocation1], 5
    %393 = vst [vmem:[%s392] ss:$9 sm:$0xff] %v270
    %s394 = scalar_lea.vmem [#allocation1], 6
    %395 = vst [vmem:[%s394] ss:$9 sm:$0xff] %v271
    %s396 = scalar_lea.vmem [#allocation1], 7
    %397 = vst [vmem:[%s396] ss:$9 sm:$0xff] %v272
    %v398 = vld [vmem:[#allocation1] sm:$0xff]
    %399 = vst [vmem:[#allocation1] ss:$9 sm:$0xff] %v217
    %400 = vst [vmem:[%s384] ss:$9 sm:$0xff] %v273
    %401 = vst [vmem:[%s386] ss:$9 sm:$0xff] %v274
    %402 = vst [vmem:[%s388] ss:$9 sm:$0xff] %v275
    %403 = vst [vmem:[%s390] ss:$9 sm:$0xff] %v276
    %404 = vst [vmem:[%s392] ss:$9 sm:$0xff] %v277
    %405 = vst [vmem:[%s394] ss:$9 sm:$0xff] %v278
    %406 = vst [vmem:[%s396] ss:$9 sm:$0xff] %v216
    %v407 = vld [vmem:[#allocation1] sm:$0xff]
    %408 = vst [vmem:[#allocation1] ss:$9 sm:$0xff] %v266
    %409 = vst [vmem:[%s384] ss:$9 sm:$0xff] %v267
    %410 = vst [vmem:[%s386] ss:$9 sm:$0xff] %v268
    %411 = vst [vmem:[%s388] ss:$9 sm:$0xff] %v269
    %412 = vst [vmem:[%s390] ss:$9 sm:$0xff] %v270
    %413 = vst [vmem:[%s392] ss:$9 sm:$0xff] %v271
    %414 = vst [vmem:[%s394] ss:$9 sm:$0xff] %v272
    %415 = vst [vmem:[%s396] ss:$9 sm:$0xff] %v217
    %v416 = vld [vmem:[#allocation1] sm:$0xff]
    %417 = vst [vmem:[#allocation1] ss:$9 sm:$0xff] %v273
    %418 = vst [vmem:[%s384] ss:$9 sm:$0xff] %v274
    %419 = vst [vmem:[%s386] ss:$9 sm:$0xff] %v275
    %420 = vst [vmem:[%s388] ss:$9 sm:$0xff] %v276
    %421 = vst [vmem:[%s390] ss:$9 sm:$0xff] %v277
    %422 = vst [vmem:[%s392] ss:$9 sm:$0xff] %v278
    %v423 = vld [vmem:[#allocation1] sm:$0xff]
    %428 = vmatpush.bf16.msra.mxu0 %v374
    %429 = vmatpush.bf16.msra.mxu0 %v373
    %430 = vmatpush.bf16.msra.mxu0 %v372
    %431 = vmatpush.bf16.msra.mxu0 %v371
    %432 = vmatpush.bf16.msra.mxu0 %v370
    %433 = vmatpush.bf16.msra.mxu0 %v369
    %434 = vmatpush.bf16.msra.mxu0 %v368
    %435 = vmatpush.bf16.msra.mxu0 %v367
    %436 = vmatmul.bf16.gmra.mxu0 %v317
    %v437 = vpop.f32.mrf.mxu0
    %v438 = vadd.f32 %v398, %v437
    %v439 = vpop.f32.mrf.mxu0
    %v440 = vadd.f32 %v407, %v439
    %441 = vmatmul.bf16.gmra.mxu0 %v332
    %v442 = vpop.f32.mrf.mxu0
    %v443 = vadd.f32 %v416, %v442
    %v444 = vpop.f32.mrf.mxu0
    %v445 = vadd.f32 %v423, %v444
    %446 = vdwg.mxu0
    %v451 = vrot.slane %v438, 1
    %v452 = vrot.slane %v438, 2
    %v453 = vrot.slane %v438, 3
    %v454 = vrot.slane %v438, 4
    %v455 = vrot.slane %v438, 5
    %v456 = vrot.slane %v438, 6
    %v457 = vrot.slane %v438, 7
    %v458 = vrot.slane %v440, 1
    %v459 = vrot.slane %v440, 2
    %v460 = vrot.slane %v440, 3
    %v461 = vrot.slane %v440, 4
    %v462 = vrot.slane %v440, 5
    %v463 = vrot.slane %v440, 6
    %v464 = vrot.slane %v440, 7
    %v465 = vrot.slane %v443, 1
    %v466 = vrot.slane %v443, 2
    %v467 = vrot.slane %v443, 3
    %v468 = vrot.slane %v443, 4
    %v469 = vrot.slane %v443, 5
    %v470 = vrot.slane %v443, 6
    %v471 = vrot.slane %v443, 7
    %v472 = vrot.slane %v445, 1
    %v473 = vrot.slane %v445, 2
    %v474 = vrot.slane %v445, 3
    %v475 = vrot.slane %v445, 4
    %v476 = vrot.slane %v445, 5
    %477 = vst [vmem:[#allocation1] ss:$9 sm:$0xff] %v438
    %s478 = scalar_lea.vmem [#allocation1], 1
    %479 = vst [vmem:[%s478] ss:$9 sm:$0xff] %v451
    %s480 = scalar_lea.vmem [#allocation1], 2
    %481 = vst [vmem:[%s480] ss:$9 sm:$0xff] %v452
    %s482 = scalar_lea.vmem [#allocation1], 3
    %483 = vst [vmem:[%s482] ss:$9 sm:$0xff] %v453
    %s484 = scalar_lea.vmem [#allocation1], 4
    %485 = vst [vmem:[%s484] ss:$9 sm:$0xff] %v454
    %s486 = scalar_lea.vmem [#allocation1], 5
    %487 = vst [vmem:[%s486] ss:$9 sm:$0xff] %v455
    %s488 = scalar_lea.vmem [#allocation1], 6
    %489 = vst [vmem:[%s488] ss:$9 sm:$0xff] %v456
    %s490 = scalar_lea.vmem [#allocation1], 7
    %491 = vst [vmem:[%s490] ss:$9 sm:$0xff] %v457
    %v492 = vld [vmem:[#allocation1] sm:$0xff]
    %493 = vst [vmem:[#allocation1] ss:$9 sm:$0xff] %v440
    %494 = vst [vmem:[%s478] ss:$9 sm:$0xff] %v458
    %495 = vst [vmem:[%s480] ss:$9 sm:$0xff] %v459
    %496 = vst [vmem:[%s482] ss:$9 sm:$0xff] %v460
    %497 = vst [vmem:[%s484] ss:$9 sm:$0xff] %v461
    %498 = vst [vmem:[%s486] ss:$9 sm:$0xff] %v462
    %499 = vst [vmem:[%s488] ss:$9 sm:$0xff] %v463
    %v500 = vld [vmem:[#allocation1] sm:$0xff]
    %501 = vst [vmem:[#allocation1] ss:$9 sm:$0xff] %v464
    %502 = vst [vmem:[%s478] ss:$9 sm:$0xff] %v443
    %503 = vst [vmem:[%s480] ss:$9 sm:$0xff] %v465
    %504 = vst [vmem:[%s482] ss:$9 sm:$0xff] %v466
    %505 = vst [vmem:[%s484] ss:$9 sm:$0xff] %v467
    %506 = vst [vmem:[%s486] ss:$9 sm:$0xff] %v468
    %507 = vst [vmem:[%s488] ss:$9 sm:$0xff] %v469
    %508 = vst [vmem:[%s490] ss:$9 sm:$0xff] %v470
    %v509 = vld [vmem:[#allocation1] sm:$0xff]
    %510 = vst [vmem:[#allocation1] ss:$9 sm:$0xff] %v471
    %511 = vst [vmem:[%s478] ss:$9 sm:$0xff] %v445
    %512 = vst [vmem:[%s480] ss:$9 sm:$0xff] %v472
    %513 = vst [vmem:[%s482] ss:$9 sm:$0xff] %v473
    %514 = vst [vmem:[%s484] ss:$9 sm:$0xff] %v474
    %515 = vst [vmem:[%s486] ss:$9 sm:$0xff] %v475
    %516 = vst [vmem:[%s488] ss:$9 sm:$0xff] %v476
    %v517 = vld [vmem:[#allocation1] sm:$0xff]
    %vm522 = vcmask 1046528
    %v523 = vsel %vm522, %v500, -inf
    %v524 = vmax.f32 %v492, %v523
    %v525 = vrot.slane %v524, 4
    %v526 = vmax.f32 %v524, %v525
    %v527 = vrot.slane %v526, 2
    %v528 = vmax.f32 %v526, %v527
    %v529 = vrot.slane %v528, 1
    %v530 = vmax.f32 %v528, %v529
    %v531 = vsel %vm522, %v517, -inf
    %v532 = vmax.f32 %v509, %v531
    %v533 = vrot.slane %v532, 4
    %v534 = vmax.f32 %v532, %v533
    %v535 = vrot.slane %v534, 2
    %v536 = vmax.f32 %v534, %v535
    %v537 = vrot.slane %v536, 1
    %v538 = vmax.f32 %v536, %v537
    %v539 = vld [vmem:[%s2] sm:$0x1]
    %v541 = vperm.slane %v539, 0
    %v543 = vadd.f32 %v530, %v541
    %v544 = vadd.f32 %v538, %v541
    %v545 = vmax.f32 %v543, 0.0
    %v546 = vmax.f32 %v544, 0.0
    %v547 = vld [vmem:[#allocation8] sm:$0xff]
    %v548 = vld [vmem:[#allocation8 + $0x8] sm:$0xff]
    %v549 = vld [vmem:[#allocation8 + $0x10] sm:$0xff]
    %v550 = vld [vmem:[#allocation8 + $0x18] sm:$0xff]
    %v551 = vld [vmem:[#allocation8 + $0x20] sm:$0xff]
    %v552 = vld [vmem:[#allocation8 + $0x28] sm:$0xff]
    %v553 = vld [vmem:[#allocation8 + $0x30] sm:$0xff]
    %v554 = vld [vmem:[#allocation8 + $0x38] sm:$0xff]
    %v555 = vld [vmem:[#allocation8 + $0x40] sm:$0xff]
    %v556 = vld [vmem:[#allocation8 + $0x48] sm:$0xff]
    %v557 = vld [vmem:[#allocation8 + $0x50] sm:$0xff]
    %v558 = vld [vmem:[#allocation8 + $0x58] sm:$0xff]
    %v559 = vld [vmem:[#allocation8 + $0x60] sm:$0xff]
    %v560 = vld [vmem:[#allocation8 + $0x68] sm:$0xff]
    %v561 = vld [vmem:[#allocation8 + $0x70] sm:$0xff]
    %v562 = vld [vmem:[#allocation8 + $0x78] sm:$0xff]
    %v563 = vld [vmem:[%s5] sm:$0x1]
    %v565 = vperm.slane %v563, 0
    %v569 = vrot.slane %v546, 7
    %vm570 = vcmask 1041409
    %v571 = vsel %vm570, %v569, %v545
    %573 = vmatpush.msra.mxu0 %v562
    %574 = vmatpush.msra.mxu0 %v561
    %575 = vmatpush.msra.mxu0 %v560
    %576 = vmatpush.msra.mxu0 %v559
    %577 = vmatpush.msra.mxu0 %v558
    %578 = vmatpush.msra.mxu0 %v557
    %579 = vmatpush.msra.mxu0 %v556
    %580 = vmatpush.msra.mxu0 %v555
    %581 = vmatpush.msra.mxu0 %v554
    %582 = vmatpush.msra.mxu0 %v553
    %583 = vmatpush.msra.mxu0 %v552
    %584 = vmatpush.msra.mxu0 %v551
    %585 = vmatpush.msra.mxu0 %v550
    %586 = vmatpush.msra.mxu0 %v549
    %587 = vmatpush.msra.mxu0 %v548
    %588 = vmatpush.msra.mxu0 %v547
    %589 = vmatmul.f32.gmra.mxu0 %v571
    %v590 = vpop.f32.mrf.mxu0
    %v591 = vadd.f32 %v565, %v590
    %592 = vdwg.mxu0
    %593 = vst [vmem:[#allocation10] sm:$0x3] %v591
    // Predicated region
    $region42: #{tpu_custom_call.1} parent=1 // pred_check
      _
    $region43: #{tpu_custom_call.1} parent=1 // pred_check_branch
      %595 = sbr.rel (0) target = $region45
    $region44: #{tpu_custom_call.1} parent=1 // pred_region
      %597 = vsyncadd [#allocation4], 0
      %s599 = sshll.u32 [#allocation10], 4
      %s600 = int_to_ptr.vmem [resolvable:$true] %s599
      %s601 = sshll.u32 %s6, 4
      %s602 = int_to_ptr.hbm [resolvable:$true] %s601
      %604 = dma.vmem_to_hbm [thread:$0]  %s600, 32, %s602, [#allocation4]
    $region45: #{tpu_custom_call.1} parent=1 // pred_fallthru
      _
    // Predicated region
    $region46: #{tpu_custom_call.1} parent=1 // pred_check
      _
    $region47: #{tpu_custom_call.1} parent=1 // pred_check_branch
      %606 = sbr.rel (0) target = $region49
    $region48: #{tpu_custom_call.1} parent=1 // pred_region
      %608 = dma.done [#allocation4], 32
    $region49: #{tpu_custom_call.1} parent=1 // pred_fallthru
      _
    %609 = vsyncpa [#allocation3], 1
    %610 = vsyncpa [#allocation6], 1
    %611 = vsyncpa [#allocation9], 1
    %612 = vsyncpa [#allocation4], 1

</llo_original>
